<compile_context>
chip_gen: v7x
topology: tpu7x:2x2x1
jax: 0.10.0
libtpu: 0.0.40
codegen_flags: <defaults>
</compile_context>

<pallas_src>
import itertools

import numpy as np
import jax
import jax.numpy as jnp
from jax.experimental import pallas as pl
from jax.experimental.pallas import tpu as pltpu

try:  # host Hungarian solver (preferred)
    from scipy.optimize import linear_sum_assignment as _scipy_lsa
except Exception:  # pragma: no cover
    _scipy_lsa = None

# HungarianMatcher defaults
COST_GAIN = {"class": 1.0, "bbox": 5.0, "giou": 2.0}
ALPHA = 0.25
GAMMA = 2.0  # == 2 -> pow replaced by explicit squaring in-kernel
EPS_LOG = 1e-8
EPS_IOU = 1e-7


def _cost_kernel(scores_ref, pb_ref, onehot_ref, gbt_ref, out_ref):
    """Compute one [TN, NG_pad] tile of the matching cost matrix.

    scores_ref: [TN, C]      raw class logits (flattened batch*queries, row tile)
    pb_ref:     [TN, 4]      predicted boxes (cx, cy, w, h), row tile
    onehot_ref: [C, NG_pad]  one_hot(gt_cls) transposed, zero-padded columns
    gbt_ref:    [4, NG_pad]  gt boxes transposed (cx, cy, w, h), zero-padded columns
    out_ref:    [TN, NG_pad] cost matrix tile
    """
    # ---- focal class cost on [TN, C] (EUP work on N*C, not N*NG_pad) ----
    logits = scores_ref[...]
    p = jax.nn.sigmoid(logits)
    q = 1.0 - p
    # gamma == 2.0 -> explicit squaring (VPU) instead of float pow (2x EUP exp/log each)
    neg_cost = (1.0 - ALPHA) * (p * p) * (-jnp.log(q + EPS_LOG))
    pos_cost = ALPHA * (q * q) * (-jnp.log(p + EPS_LOG))
    cls_cost_all = pos_cost - neg_cost                        # [TN, C]
    # exact gather of per-class cost via one-hot matmul -> MXU, [TN, NG_pad]
    cost_class = jnp.dot(cls_cost_all, onehot_ref[...],
                         preferred_element_type=jnp.float32)

    # ---- bbox costs: broadcast [TN,1] x [1,NG_pad] ----
    pb = pb_ref[...]    # [TN, 4]
    gbt = gbt_ref[...]  # [4, NG_pad]
    px, py, pw, ph = (pb[:, k:k + 1] for k in range(4))       # each [TN, 1]
    gx, gy, gw, gh = (gbt[k:k + 1, :] for k in range(4))      # each [1, NG_pad]

    # hoisted per-box quantities (computed once per block on small shapes)
    p_area = pw * ph                                          # [TN, 1]
    g_area = gw * gh                                          # [1, NG_pad]
    b1x1, b1x2 = px - pw * 0.5, px + pw * 0.5
    b1y1, b1y2 = py - ph * 0.5, py + ph * 0.5
    b2x1, b2x2 = gx - gw * 0.5, gx + gw * 0.5
    b2y1, b2y2 = gy - gh * 0.5, gy + gh * 0.5

    # L1 bbox cost (sum over 4 coords)
    cost_bbox = (jnp.abs(px - gx) + jnp.abs(py - gy)
                 + jnp.abs(pw - gw) + jnp.abs(ph - gh))

    # GIoU cost (xywh -> xyxy, ultralytics bbox_iou semantics, eps=1e-7)
    inter_w = jnp.maximum(jnp.minimum(b1x2, b2x2) - jnp.maximum(b1x1, b2x1), 0.0)
    inter_h = jnp.maximum(jnp.minimum(b1y2, b2y2) - jnp.maximum(b1y1, b2y1), 0.0)
    inter = inter_w * inter_h
    union = p_area + g_area - inter + EPS_IOU
    inv_union = pl.reciprocal(union)                          # exact recip + mul
    iou = inter * inv_union
    cw = jnp.maximum(b1x2, b2x2) - jnp.minimum(b1x1, b2x1)
    ch = jnp.maximum(b1y2, b2y2) - jnp.minimum(b1y1, b2y1)
    c_area = cw * ch + EPS_IOU
    inv_carea = pl.reciprocal(c_area)
    giou = iou - (c_area - union) * inv_carea
    cost_giou = 1.0 - giou

    C = (COST_GAIN["class"] * cost_class
         + COST_GAIN["bbox"] * cost_bbox
         + COST_GAIN["giou"] * cost_giou)
    # C[C.isnan() | C.isinf()] = 0.0
    out_ref[...] = jnp.where(jnp.isfinite(C), C, 0.0)


def _round_up(x, m):
    return ((x + m - 1) // m) * m


def cost_matrix_pallas(pred_bboxes, pred_scores, gt_bboxes, gt_cls):
    """Flatten / pad / transpose inputs and invoke the Pallas kernel. Returns [B, Q, NG]."""
    bs, nq, nc = pred_scores.shape
    ng = gt_bboxes.shape[0]
    N = bs * nq

    # lane-dense GT axis: pad NG up to a multiple of 128
    ngp = max(128, _round_up(ng, 128))

    # row tile over the flattened query axis; blocks stay tiny vs. VMEM
    # (TN=512, ngp=512, C<=80 -> ~1.2 MiB per block, double-buffered ~2.5 MiB; fine
    #  under the 16/32 MiB scoped-VMEM defaults on v5e/v6e/v7x)
    TN = 512 if N >= 512 else _round_up(N, 8)
    Np = _round_up(N, TN)

    scores_flat = pred_scores.reshape(N, nc).astype(jnp.float32)
    pb_flat = pred_bboxes.reshape(N, 4).astype(jnp.float32)
    if Np != N:
        scores_flat = jnp.pad(scores_flat, ((0, Np - N), (0, 0)))
        pb_flat = jnp.pad(pb_flat, ((0, Np - N), (0, 0)))

    onehot_t = jax.nn.one_hot(gt_cls, nc, dtype=jnp.float32).T               # [nc, ng]
    onehot_t = jnp.pad(onehot_t, ((0, 0), (0, ngp - ng)))                    # [nc, ngp]
    gbt = jnp.pad(gt_bboxes.astype(jnp.float32).T, ((0, 0), (0, ngp - ng)))  # [4, ngp]

    grid = (Np // TN,)
    C = pl.pallas_call(
        _cost_kernel,
        out_shape=jax.ShapeDtypeStruct((Np, ngp), jnp.float32),
        grid_spec=pltpu.PrefetchScalarGridSpec(
            num_scalar_prefetch=0,
            grid=grid,
            in_specs=[
                pl.BlockSpec((TN, nc), lambda i: (i, 0)),   # scores: tiled over N
                pl.BlockSpec((TN, 4), lambda i: (i, 0)),    # pred boxes: tiled over N
                pl.BlockSpec((nc, ngp), lambda i: (0, 0)),  # one-hot: resident
                pl.BlockSpec((4, ngp), lambda i: (0, 0)),   # gt boxes: resident
            ],
            out_specs=pl.BlockSpec((TN, ngp), lambda i: (i, 0)),
        ),
        compiler_params=pltpu.CompilerParams(
            dimension_semantics=("parallel",),  # v7x: shard N tiles across both TCs
        ),
    )(scores_flat, pb_flat, onehot_t, gbt)

    # slice off N/NG padding before the host solve (pad columns carry junk costs)
    return C[:N, :ng].reshape(bs, nq, ng)


def _lsa_bruteforce(c):
    """Exact linear_sum_assignment for a tiny [nq, ng] cost matrix (ng <= nq)."""
    nq, ng = c.shape
    best, best_cost = None, np.inf
    for perm in itertools.permutations(range(nq), ng):
        cost = sum(c[perm[j], j] for j in range(ng))
        if cost < best_cost:
            best_cost, best = cost, perm
    rows = np.array(best, dtype=np.int64)
    cols = np.arange(ng, dtype=np.int64)
    order = np.argsort(rows)
    return rows[order], cols[order]


def _lsa(c):
    if _scipy_lsa is not None:
        i, j = _scipy_lsa(c)
        return np.asarray(i, dtype=np.int64), np.asarray(j, dtype=np.int64)
    return _lsa_bruteforce(c)


def hungarian_matcher_forward(pred_bboxes, pred_scores, gt_bboxes, gt_cls, gt_groups):
    """Mirrors HungarianMatcher.forward (use_fl=True, with_mask=False)."""
    bs, nq, _ = pred_scores.shape
    if sum(gt_groups) == 0:
        return [(np.array([], dtype=np.int64), np.array([], dtype=np.int64)) for _ in range(bs)]

    C = cost_matrix_pallas(pred_bboxes, pred_scores, gt_bboxes, gt_cls)
    C = np.asarray(jax.block_until_ready(C))  # [bs, nq, sum(gt_groups)]

    # TODO(synk): linear_sum_assignment (Hungarian algorithm) is data-dependent
    # combinatorial optimization with no clean Pallas equivalent; solved on host.
    offsets = np.cumsum([0] + list(gt_groups[:-1]))
    indices = []
    start = 0
    for k, g in enumerate(gt_groups):
        if g == 0:
            indices.append((np.array([], dtype=np.int64), np.array([], dtype=np.int64)))
        else:
            i, j = _lsa(C[k, :, start:start + g])
            indices.append((i, j + offsets[k]))
        start += g
    return indices


def _cost_matrix_ref_numpy(pred_bboxes, pred_scores, gt_bboxes, gt_cls):
    """Pure-numpy reference of the cost matrix for a correctness check."""
    bs, nq, nc = pred_scores.shape
    ps = np.asarray(pred_scores, np.float32).reshape(-1, nc)
    pb = np.asarray(pred_bboxes, np.float32).reshape(-1, 4)
    gb = np.asarray(gt_bboxes, np.float32)
    gc = np.asarray(gt_cls)
    p = 1.0 / (1.0 + np.exp(-ps[:, gc]))
    neg = (1 - ALPHA) * p ** GAMMA * -np.log(1 - p + EPS_LOG)
    pos = ALPHA * (1 - p) ** GAMMA * -np.log(p + EPS_LOG)
    cost_class = pos - neg
    cost_bbox = np.abs(pb[:, None, :] - gb[None, :, :]).sum(-1)
    px, py, pw, ph = (pb[:, None, k] for k in range(4))
    gx, gy, gw, gh = (gb[None, :, k] for k in range(4))
    b1x1, b1x2, b1y1, b1y2 = px - pw / 2, px + pw / 2, py - ph / 2, py + ph / 2
    b2x1, b2x2, b2y1, b2y2 = gx - gw / 2, gx + gw / 2, gy - gh / 2, gy + gh / 2
    inter = (np.clip(np.minimum(b1x2, b2x2) - np.maximum(b1x1, b2x1), 0, None)
             * np.clip(np.minimum(b1y2, b2y2) - np.maximum(b1y1, b2y1), 0, None))
    union = pw * ph + gw * gh - inter + EPS_IOU
    iou = inter / union
    cw = np.maximum(b1x2, b2x2) - np.minimum(b1x1, b2x1)
    ch = np.maximum(b1y2, b2y2) - np.minimum(b1y1, b2y1)
    c_area = cw * ch + EPS_IOU
    giou = iou - (c_area - union) / c_area
    C = COST_GAIN["class"] * cost_class + COST_GAIN["bbox"] * cost_bbox + COST_GAIN["giou"] * (1.0 - giou)
    C[~np.isfinite(C)] = 0.0
    return C.reshape(bs, nq, -1)


if __name__ == "__main__":
    key = jax.random.PRNGKey(0)
    bs, nq, nc = 2, 8, 32
    gt_groups = [3, 2]
    num_gts = sum(gt_groups)

    k1, k2, k3, k4 = jax.random.split(key, 4)
    pred_bboxes = jax.random.uniform(k1, (bs, nq, 4), jnp.float32, 0.05, 0.95)
    pred_scores = jax.random.normal(k2, (bs, nq, nc), jnp.float32)
    gt_bboxes = jax.random.uniform(k3, (num_gts, 4), jnp.float32, 0.05, 0.95)
    gt_cls = jax.random.randint(k4, (num_gts,), 0, nc, jnp.int32)

    # Run the Pallas kernel (cost matrix) once and check against the numpy reference.
    C_pallas = jax.block_until_ready(
        cost_matrix_pallas(pred_bboxes, pred_scores, gt_bboxes, gt_cls))
    C_ref = _cost_matrix_ref_numpy(pred_bboxes, pred_scores, gt_bboxes, gt_cls)
    np.testing.assert_allclose(np.asarray(C_pallas), C_ref, rtol=1e-4, atol=1e-4)

    # Full forward pass (cost matrix on TPU + Hungarian solve on host).
    matches = hungarian_matcher_forward(pred_bboxes, pred_scores, gt_bboxes, gt_cls, gt_groups)
    assert len(matches) == bs
    for k, (i, j) in enumerate(matches):
        assert len(i) == len(j) == min(nq, gt_groups[k])

    print("KERNEL_OK")
</pallas_src>

<mosaic_0001>
module attributes {stable_mosaic.version = 11 : i64} {
  func.func @_cost_kernel(%arg0: i32, %arg1: memref<16x32xf32, #tpu.memory_space<vmem>>, %arg2: memref<16x4xf32, #tpu.memory_space<vmem>>, %arg3: memref<32x128xf32, #tpu.memory_space<vmem>>, %arg4: memref<4x128xf32, #tpu.memory_space<vmem>>, %arg5: memref<16x128xf32, #tpu.memory_space<vmem>>) attributes {dimension_semantics = [#tpu.dimension_semantics<parallel>], iteration_bounds = array<i64: 1>, scalar_prefetch = 0 : i64, scratch_operands = 0 : i64, tpu.core_type = #tpu.core_type<tc>, window_params = [{transform_indices = @transform_0, window_bounds = array<i64: 16, 32>}, {transform_indices = @transform_1, window_bounds = array<i64: 16, 4>}, {pipeline_mode = #tpu.pipeline_mode<synchronous>, transform_indices = @transform_2, window_bounds = array<i64: 32, 128>}, {pipeline_mode = #tpu.pipeline_mode<synchronous>, transform_indices = @transform_3, window_bounds = array<i64: 4, 128>}, {transform_indices = @transform_4, window_bounds = array<i64: 16, 128>}]} {
    %c0 = arith.constant 0 : index
    %c0_0 = arith.constant 0 : index
    %0 = vector.load %arg1[%c0, %c0_0] : memref<16x32xf32, #tpu.memory_space<vmem>>, vector<16x32xf32>
    %1 = arith.negf %0 : vector<16x32xf32>
    %2 = math.exp %1 : vector<16x32xf32>
    %cst = arith.constant 1.000000e+00 : f32
    %3 = vector.broadcast %cst : f32 to vector<16x32xf32>
    %4 = arith.addf %3, %2 : vector<16x32xf32>
    %5 = arith.divf %3, %4 : vector<16x32xf32>
    %cst_1 = arith.constant 1.000000e+00 : f32
    %6 = vector.broadcast %cst_1 : f32 to vector<16x32xf32>
    %7 = arith.subf %6, %5 : vector<16x32xf32>
    %8 = arith.mulf %5, %5 : vector<16x32xf32>
    %cst_2 = arith.constant 7.500000e-01 : f32
    %9 = vector.broadcast %cst_2 : f32 to vector<16x32xf32>
    %10 = arith.mulf %9, %8 : vector<16x32xf32>
    %cst_3 = arith.constant 9.99999993E-9 : f32
    %11 = vector.broadcast %cst_3 : f32 to vector<16x32xf32>
    %12 = arith.addf %7, %11 : vector<16x32xf32>
    %13 = math.log %12 : vector<16x32xf32>
    %cst_4 = arith.constant 0.000000e+00 : f32
    %14 = vector.broadcast %cst_4 : f32 to vector<16x32xf32>
    %15 = arith.subf %14, %13 : vector<16x32xf32>
    %16 = arith.mulf %10, %15 : vector<16x32xf32>
    %17 = arith.mulf %7, %7 : vector<16x32xf32>
    %cst_5 = arith.constant 2.500000e-01 : f32
    %18 = vector.broadcast %cst_5 : f32 to vector<16x32xf32>
    %19 = arith.mulf %18, %17 : vector<16x32xf32>
    %cst_6 = arith.constant 9.99999993E-9 : f32
    %20 = vector.broadcast %cst_6 : f32 to vector<16x32xf32>
    %21 = arith.addf %5, %20 : vector<16x32xf32>
    %22 = math.log %21 : vector<16x32xf32>
    %cst_7 = arith.constant 0.000000e+00 : f32
    %23 = vector.broadcast %cst_7 : f32 to vector<16x32xf32>
    %24 = arith.subf %23, %22 : vector<16x32xf32>
    %25 = arith.mulf %19, %24 : vector<16x32xf32>
    %26 = arith.subf %25, %16 : vector<16x32xf32>
    %c0_8 = arith.constant 0 : index
    %c0_9 = arith.constant 0 : index
    %27 = vector.load %arg3[%c0_8, %c0_9] : memref<32x128xf32, #tpu.memory_space<vmem>>, vector<32x128xf32>
    %cst_10 = arith.constant dense<0.000000e+00> : vector<16x128xf32>
    %28 = tpu.matmul %26, %27, %cst_10 {dimension_numbers = #tpu.dot_dimension_numbers<[1], [0], [0], [1], [0, 0, 1, 1], [], []>} : vector<16x32xf32>, vector<32x128xf32>, vector<16x128xf32> -> vector<16x128xf32>
    %c0_11 = arith.constant 0 : index
    %c0_12 = arith.constant 0 : index
    %29 = vector.load %arg2[%c0_11, %c0_12] : memref<16x4xf32, #tpu.memory_space<vmem>>, vector<16x4xf32>
    %c0_13 = arith.constant 0 : index
    %c0_14 = arith.constant 0 : index
    %30 = vector.load %arg4[%c0_13, %c0_14] : memref<4x128xf32, #tpu.memory_space<vmem>>, vector<4x128xf32>
    %31 = vector.extract_strided_slice %29 {offsets = [0, 0], sizes = [16, 1], strides = [1, 1]} : vector<16x4xf32> to vector<16x1xf32>
    %32 = vector.extract_strided_slice %29 {offsets = [0, 1], sizes = [16, 1], strides = [1, 1]} : vector<16x4xf32> to vector<16x1xf32>
    %33 = vector.extract_strided_slice %29 {offsets = [0, 2], sizes = [16, 1], strides = [1, 1]} : vector<16x4xf32> to vector<16x1xf32>
    %34 = vector.extract_strided_slice %29 {offsets = [0, 3], sizes = [16, 1], strides = [1, 1]} : vector<16x4xf32> to vector<16x1xf32>
    %35 = vector.extract_strided_slice %30 {offsets = [0, 0], sizes = [1, 128], strides = [1, 1]} : vector<4x128xf32> to vector<1x128xf32>
    %36 = vector.extract_strided_slice %30 {offsets = [1, 0], sizes = [1, 128], strides = [1, 1]} : vector<4x128xf32> to vector<1x128xf32>
    %37 = vector.extract_strided_slice %30 {offsets = [2, 0], sizes = [1, 128], strides = [1, 1]} : vector<4x128xf32> to vector<1x128xf32>
    %38 = vector.extract_strided_slice %30 {offsets = [3, 0], sizes = [1, 128], strides = [1, 1]} : vector<4x128xf32> to vector<1x128xf32>
    %39 = arith.mulf %33, %34 : vector<16x1xf32>
    %40 = arith.mulf %37, %38 : vector<1x128xf32>
    %cst_15 = arith.constant 5.000000e-01 : f32
    %41 = vector.broadcast %cst_15 : f32 to vector<16x1xf32>
    %42 = arith.mulf %33, %41 : vector<16x1xf32>
    %43 = arith.subf %31, %42 : vector<16x1xf32>
    %cst_16 = arith.constant 5.000000e-01 : f32
    %44 = vector.broadcast %cst_16 : f32 to vector<16x1xf32>
    %45 = arith.mulf %33, %44 : vector<16x1xf32>
    %46 = arith.addf %31, %45 : vector<16x1xf32>
    %cst_17 = arith.constant 5.000000e-01 : f32
    %47 = vector.broadcast %cst_17 : f32 to vector<16x1xf32>
    %48 = arith.mulf %34, %47 : vector<16x1xf32>
    %49 = arith.subf %32, %48 : vector<16x1xf32>
    %cst_18 = arith.constant 5.000000e-01 : f32
    %50 = vector.broadcast %cst_18 : f32 to vector<16x1xf32>
    %51 = arith.mulf %34, %50 : vector<16x1xf32>
    %52 = arith.addf %32, %51 : vector<16x1xf32>
    %cst_19 = arith.constant 5.000000e-01 : f32
    %53 = vector.broadcast %cst_19 : f32 to vector<1x128xf32>
    %54 = arith.mulf %37, %53 : vector<1x128xf32>
    %55 = arith.subf %35, %54 : vector<1x128xf32>
    %cst_20 = arith.constant 5.000000e-01 : f32
    %56 = vector.broadcast %cst_20 : f32 to vector<1x128xf32>
    %57 = arith.mulf %37, %56 : vector<1x128xf32>
    %58 = arith.addf %35, %57 : vector<1x128xf32>
    %cst_21 = arith.constant 5.000000e-01 : f32
    %59 = vector.broadcast %cst_21 : f32 to vector<1x128xf32>
    %60 = arith.mulf %38, %59 : vector<1x128xf32>
    %61 = arith.subf %36, %60 : vector<1x128xf32>
    %cst_22 = arith.constant 5.000000e-01 : f32
    %62 = vector.broadcast %cst_22 : f32 to vector<1x128xf32>
    %63 = arith.mulf %38, %62 : vector<1x128xf32>
    %64 = arith.addf %36, %63 : vector<1x128xf32>
    %65 = vector.broadcast %31 : vector<16x1xf32> to vector<16x128xf32>
    %66 = vector.broadcast %35 : vector<1x128xf32> to vector<16x128xf32>
    %67 = arith.subf %65, %66 : vector<16x128xf32>
    %68 = math.absf %67 : vector<16x128xf32>
    %69 = vector.broadcast %32 : vector<16x1xf32> to vector<16x128xf32>
    %70 = vector.broadcast %36 : vector<1x128xf32> to vector<16x128xf32>
    %71 = arith.subf %69, %70 : vector<16x128xf32>
    %72 = math.absf %71 : vector<16x128xf32>
    %73 = arith.addf %68, %72 : vector<16x128xf32>
    %74 = vector.broadcast %33 : vector<16x1xf32> to vector<16x128xf32>
    %75 = vector.broadcast %37 : vector<1x128xf32> to vector<16x128xf32>
    %76 = arith.subf %74, %75 : vector<16x128xf32>
    %77 = math.absf %76 : vector<16x128xf32>
    %78 = arith.addf %73, %77 : vector<16x128xf32>
    %79 = vector.broadcast %34 : vector<16x1xf32> to vector<16x128xf32>
    %80 = vector.broadcast %38 : vector<1x128xf32> to vector<16x128xf32>
    %81 = arith.subf %79, %80 : vector<16x128xf32>
    %82 = math.absf %81 : vector<16x128xf32>
    %83 = arith.addf %78, %82 : vector<16x128xf32>
    %84 = vector.broadcast %46 : vector<16x1xf32> to vector<16x128xf32>
    %85 = vector.broadcast %58 : vector<1x128xf32> to vector<16x128xf32>
    %86 = arith.minimumf %84, %85 : vector<16x128xf32>
    %87 = vector.broadcast %43 : vector<16x1xf32> to vector<16x128xf32>
    %88 = vector.broadcast %55 : vector<1x128xf32> to vector<16x128xf32>
    %89 = arith.maximumf %87, %88 : vector<16x128xf32>
    %90 = arith.subf %86, %89 : vector<16x128xf32>
    %cst_23 = arith.constant 0.000000e+00 : f32
    %91 = vector.broadcast %cst_23 : f32 to vector<16x128xf32>
    %92 = arith.maximumf %90, %91 : vector<16x128xf32>
    %93 = vector.broadcast %52 : vector<16x1xf32> to vector<16x128xf32>
    %94 = vector.broadcast %64 : vector<1x128xf32> to vector<16x128xf32>
    %95 = arith.minimumf %93, %94 : vector<16x128xf32>
    %96 = vector.broadcast %49 : vector<16x1xf32> to vector<16x128xf32>
    %97 = vector.broadcast %61 : vector<1x128xf32> to vector<16x128xf32>
    %98 = arith.maximumf %96, %97 : vector<16x128xf32>
    %99 = arith.subf %95, %98 : vector<16x128xf32>
    %cst_24 = arith.constant 0.000000e+00 : f32
    %100 = vector.broadcast %cst_24 : f32 to vector<16x128xf32>
    %101 = arith.maximumf %99, %100 : vector<16x128xf32>
    %102 = arith.mulf %92, %101 : vector<16x128xf32>
    %103 = vector.broadcast %39 : vector<16x1xf32> to vector<16x128xf32>
    %104 = vector.broadcast %40 : vector<1x128xf32> to vector<16x128xf32>
    %105 = arith.addf %103, %104 : vector<16x128xf32>
    %106 = arith.subf %105, %102 : vector<16x128xf32>
    %cst_25 = arith.constant 1.000000e-07 : f32
    %107 = vector.broadcast %cst_25 : f32 to vector<16x128xf32>
    %108 = arith.addf %106, %107 : vector<16x128xf32>
    %109 = tpu.reciprocal %108 : vector<16x128xf32> -> vector<16x128xf32>
    %110 = arith.mulf %102, %109 : vector<16x128xf32>
    %111 = vector.broadcast %46 : vector<16x1xf32> to vector<16x128xf32>
    %112 = vector.broadcast %58 : vector<1x128xf32> to vector<16x128xf32>
    %113 = arith.maximumf %111, %112 : vector<16x128xf32>
    %114 = vector.broadcast %43 : vector<16x1xf32> to vector<16x128xf32>
    %115 = vector.broadcast %55 : vector<1x128xf32> to vector<16x128xf32>
    %116 = arith.minimumf %114, %115 : vector<16x128xf32>
    %117 = arith.subf %113, %116 : vector<16x128xf32>
    %118 = vector.broadcast %52 : vector<16x1xf32> to vector<16x128xf32>
    %119 = vector.broadcast %64 : vector<1x128xf32> to vector<16x128xf32>
    %120 = arith.maximumf %118, %119 : vector<16x128xf32>
    %121 = vector.broadcast %49 : vector<16x1xf32> to vector<16x128xf32>
    %122 = vector.broadcast %61 : vector<1x128xf32> to vector<16x128xf32>
    %123 = arith.minimumf %121, %122 : vector<16x128xf32>
    %124 = arith.subf %120, %123 : vector<16x128xf32>
    %125 = arith.mulf %117, %124 : vector<16x128xf32>
    %cst_26 = arith.constant 1.000000e-07 : f32
    %126 = vector.broadcast %cst_26 : f32 to vector<16x128xf32>
    %127 = arith.addf %125, %126 : vector<16x128xf32>
    %128 = tpu.reciprocal %127 : vector<16x128xf32> -> vector<16x128xf32>
    %129 = arith.subf %127, %108 : vector<16x128xf32>
    %130 = arith.mulf %129, %128 : vector<16x128xf32>
    %131 = arith.subf %110, %130 : vector<16x128xf32>
    %cst_27 = arith.constant 1.000000e+00 : f32
    %132 = vector.broadcast %cst_27 : f32 to vector<16x128xf32>
    %133 = arith.subf %132, %131 : vector<16x128xf32>
    %cst_28 = arith.constant 1.000000e+00 : f32
    %134 = vector.broadcast %cst_28 : f32 to vector<16x128xf32>
    %135 = arith.mulf %134, %28 : vector<16x128xf32>
    %cst_29 = arith.constant 5.000000e+00 : f32
    %136 = vector.broadcast %cst_29 : f32 to vector<16x128xf32>
    %137 = arith.mulf %136, %83 : vector<16x128xf32>
    %138 = arith.addf %135, %137 : vector<16x128xf32>
    %cst_30 = arith.constant 2.000000e+00 : f32
    %139 = vector.broadcast %cst_30 : f32 to vector<16x128xf32>
    %140 = arith.mulf %139, %133 : vector<16x128xf32>
    %141 = arith.addf %138, %140 : vector<16x128xf32>
    %142 = tpu.weird %141 : vector<16x128xf32> -> vector<16x128xi1>
    %cst_31 = arith.constant dense<true> : vector<16x128xi1>
    %143 = arith.xori %142, %cst_31 : vector<16x128xi1>
    %cst_32 = arith.constant 0.000000e+00 : f32
    %144 = vector.broadcast %cst_32 : f32 to vector<16x128xf32>
    %145 = arith.select %143, %141, %144 : vector<16x128xi1>, vector<16x128xf32>
    %c0_33 = arith.constant 0 : index
    %c0_34 = arith.constant 0 : index
    %146 = vector.load %arg5[%c0_33, %c0_34] : memref<16x128xf32, #tpu.memory_space<vmem>>, vector<16x128xf32>
    tpu.vector_store %arg5[%c0_33, %c0_34], %145 {strides = array<i32>} : memref<16x128xf32, #tpu.memory_space<vmem>>, vector<16x128xf32>,
    return
  }
  func.func @transform_0(%arg0: i32) -> (i32, i32) {
    %c0_i32 = arith.constant 0 : i32
    %c0_i32_0 = arith.constant 0 : i32
    return %arg0, %c0_i32 : i32, i32
  }
  func.func @transform_1(%arg0: i32) -> (i32, i32) {
    %c0_i32 = arith.constant 0 : i32
    %c0_i32_0 = arith.constant 0 : i32
    return %arg0, %c0_i32 : i32, i32
  }
  func.func @transform_2(%arg0: i32) -> (i32, i32) {
    %c0_i32 = arith.constant 0 : i32
    %c0_i32_0 = arith.constant 0 : i32
    %c0_i32_1 = arith.constant 0 : i32
    return %c0_i32, %c0_i32_0 : i32, i32
  }
  func.func @transform_3(%arg0: i32) -> (i32, i32) {
    %c0_i32 = arith.constant 0 : i32
    %c0_i32_0 = arith.constant 0 : i32
    %c0_i32_1 = arith.constant 0 : i32
    return %c0_i32, %c0_i32_0 : i32, i32
  }
  func.func @transform_4(%arg0: i32) -> (i32, i32) {
    %c0_i32 = arith.constant 0 : i32
    %c0_i32_0 = arith.constant 0 : i32
    return %arg0, %c0_i32 : i32, i32
  }
}

</mosaic_0001>

<llo_original>
// kernel: tpu_custom_call.1
$region0: #{tpu_custom_call.1}
  #allocation0 [shape = 'u32[]', space=smem, size = 0x4, offset = 0x4, fixed_abs, tag = 'smem constant byte address 0x4 - core index']
  #allocation1 [shape = 'u32[144,128]{1,0:T(1,128)}', space=vmem, size = 0x12000, scoped, tag = 'internal scratch']
  %s0 = inlined_call_operand.vmem [shape: f32[16,32], index: 0, kind: input, shape index: {}]
  %s1 = inlined_call_operand.vmem [shape: f32[16,4], index: 1, kind: input, shape index: {}]
  %s2 = inlined_call_operand.hbm [shape: f32[32,128], index: 2, kind: input, shape index: {}]
  %s3 = inlined_call_operand.vmem [shape: f32[4,128], index: 3, kind: input, shape index: {}]
  %s4 = inlined_call_operand.hbm [shape: f32[16,128], index: 4, kind: output, shape index: {}]
  %s5 = sld [smem:[#allocation0]]
  $region30: #{tpu_custom_call.1} parent=0
    _
  %s7 = ssub.s32 1, %s5
  %s8 = scalar_select 0, %s7, %s5
  $region1: #{tpu_custom_call.1} parent=0
    #allocation2 [shape = 'u8[16384]{0}', space=vmem, size = 0x4000, scoped, tag = 'input window, operand 2, single buffered']
    #allocation3 [shape = 's32[1]{0}', space=sflag, size = 0x4, scoped, tag = 'scoped memory for tpu_custom_call.1']
    #allocation4 [shape = 's32[1]{0}', space=sflag, size = 0x4, scoped, tag = 'scoped memory for tpu_custom_call.1']
    #allocation5 [shape = 'u8[8192]{0}', space=vmem, size = 0x2000, scoped, tag = 'output window, operand 0, single buffered']
    %9 = vsyncpa [#allocation3], 0
    %10 = vsyncpa [#allocation4], 0
    // Predicated region
    $region2: #{tpu_custom_call.1} parent=1 // pred_check
      _
    $region3: #{tpu_custom_call.1} parent=1 // pred_check_branch
      %12 = sbr.rel (0) target = $region5
    $region4: #{tpu_custom_call.1} parent=1 // pred_region
      _
    $region5: #{tpu_custom_call.1} parent=1 // pred_fallthru
      _
    // Predicated region
    $region6: #{tpu_custom_call.1} parent=1 // pred_check
      _
    $region7: #{tpu_custom_call.1} parent=1 // pred_check_branch
      %14 = sbr.rel (0) target = $region9
    $region8: #{tpu_custom_call.1} parent=1 // pred_region
      _
    $region9: #{tpu_custom_call.1} parent=1 // pred_fallthru
      _
    // Predicated region
    $region10: #{tpu_custom_call.1} parent=1 // pred_check
      _
    $region11: #{tpu_custom_call.1} parent=1 // pred_check_branch
      %16 = sbr.rel (0) target = $region13
    $region12: #{tpu_custom_call.1} parent=1 // pred_region
      %s18 = ssub.s32 512, 512
      %19 = vsyncadd [#allocation3], %s18
      %s20 = sshll.u32 [#allocation2], 4
      %s21 = int_to_ptr.vmem [resolvable:$true] %s20
      %26 = dma.hbm_to_vmem [thread:$0]  %s2, 512, %s21, [#allocation3], 128, 128, 8
    $region13: #{tpu_custom_call.1} parent=1 // pred_fallthru
      _
    // Predicated region
    $region14: #{tpu_custom_call.1} parent=1 // pred_check
      _
    $region15: #{tpu_custom_call.1} parent=1 // pred_check_branch
      %28 = sbr.rel (0) target = $region17
    $region16: #{tpu_custom_call.1} parent=1 // pred_region
      _
    $region17: #{tpu_custom_call.1} parent=1 // pred_fallthru
      _
    // Predicated region
    $region18: #{tpu_custom_call.1} parent=1 // pred_check
      _
    $region19: #{tpu_custom_call.1} parent=1 // pred_check_branch
      %30 = sbr.rel (0) target = $region21
    $region20: #{tpu_custom_call.1} parent=1 // pred_region
      %31 = dma.done [#allocation3], 512
    $region21: #{tpu_custom_call.1} parent=1 // pred_fallthru
      _
    %v32 = vld [vmem:[%s0] sm:$0xff]
    %v33 = vld [vmem:[%s0 + $0x8] sm:$0xff]
    %v34 = vxor.u32 %v32, 2147483648
    %v35 = vxor.u32 %v33, 2147483648
    %v36 = vmul.f32 %v34, 1.442695
    %v37 = vpow.pop %v36
    %v38 = vmul.f32 %v35, 1.442695
    %v39 = vpow.pop %v38
    %v40 = vadd.f32 %v37, 1.0
    %v41 = vadd.f32 %v39, 1.0
    %v42 = vrcp.pop %v40
    %v43 = vmul.f32 1.0, %v42
    %v44 = vrcp.pop %v41
    %v45 = vmul.f32 1.0, %v44
    %v46 = vsub.f32 1.0, %v43
    %v47 = vsub.f32 1.0, %v45
    %v48 = vmul.f32 %v43, %v43
    %v49 = vmul.f32 %v45, %v45
    %v50 = vmul.f32 %v48, 0.75
    %v51 = vmul.f32 %v49, 0.75
    %v52 = vadd.f32 %v46, 1e-08
    %v53 = vadd.f32 %v47, 1e-08
    %v54 = vlog2.pop %v52
    %v55 = vmul.f32 %v54, 0.6931472
    %v56 = vlog2.pop %v53
    %v57 = vmul.f32 %v56, 0.6931472
    %v58 = vsub.f32 0.0, %v55
    %v59 = vsub.f32 0.0, %v57
    %v60 = vmul.f32 %v50, %v58
    %v61 = vmul.f32 %v51, %v59
    %v62 = vmul.f32 %v46, %v46
    %v63 = vmul.f32 %v47, %v47
    %v64 = vmul.f32 %v62, 0.25
    %v65 = vmul.f32 %v63, 0.25
    %v66 = vadd.f32 %v43, 1e-08
    %v67 = vadd.f32 %v45, 1e-08
    %v68 = vlog2.pop %v66
    %v69 = vmul.f32 %v68, 0.6931472
    %v70 = vlog2.pop %v67
    %v71 = vmul.f32 %v70, 0.6931472
    %v72 = vsub.f32 0.0, %v69
    %v73 = vsub.f32 0.0, %v71
    %v74 = vmul.f32 %v64, %v72
    %v75 = vmul.f32 %v65, %v73
    %v76 = vsub.f32 %v74, %v60
    %v77 = vsub.f32 %v75, %v61
    %v78 = vld [vmem:[#allocation2] sm:$0xff]
    %v79 = vld [vmem:[#allocation2 + $0x8] sm:$0xff]
    %v80 = vld [vmem:[#allocation2 + $0x10] sm:$0xff]
    %v81 = vld [vmem:[#allocation2 + $0x18] sm:$0xff]
    %v82 = vld [vmem:[%s1] sm:$0xff]
    %v83 = vld [vmem:[%s1 + $0x8] sm:$0xff]
    %v84 = vld [vmem:[%s3] sm:$0xf]
    %87 = vrot.lane.b32.xlu0 %v82, 127
    %v88 = vpop.permute.xlu0 %87
    %89 = vrot.lane.b32.xlu0 %v83, 127
    %v90 = vpop.permute.xlu0 %89
    %v93 = vmul.f32 %v82, %v88
    %v94 = vmul.f32 %v83, %v90
    %v96 = vrot.slane %v84, 1
    %v98 = vmul.f32 %v84, %v96
    %v99 = vmul.f32 %v82, 0.5
    %v100 = vmul.f32 %v83, 0.5
    %103 = vrot.lane.b32.xlu0 %v99, 126
    %v104 = vpop.permute.xlu0 %103
    %105 = vrot.lane.b32.xlu0 %v100, 126
    %v106 = vpop.permute.xlu0 %105
    %v109 = vsub.f32 %v82, %v104
    %v110 = vsub.f32 %v83, %v106
    %v111 = vadd.f32 %v82, %v104
    %v112 = vadd.f32 %v83, %v106
    %v113 = vmul.f32 %v84, 0.5
    %v115 = vrot.slane %v113, 2
    %v117 = vsub.f32 %v84, %v115
    %v118 = vadd.f32 %v84, %v115
    %119 = vset.pattern.permute.xlu0 0
    %120 = vperm.xlu0 %119, %v82
    %v121 = vpop.permute.xlu0 %120
    %123 = vset.pattern.permute.xlu0 0
    %124 = vperm.xlu0 %123, %v83
    %v125 = vpop.permute.xlu0 %124
    %v127 = vlaneseq
    %v128 = vshrl.u32 %v127, 7
    %v129 = vsub.s32 0, %v128
    %v130 = vrot.slane %v84, %v129
    %v131 = vsub.f32 %v121, %v130
    %v132 = vsub.f32 %v125, %v130
    %v133 = vand.u32 2147483647, %v131
    %v134 = vand.u32 2147483647, %v132
    %135 = vset.pattern.permute.xlu0 1
    %136 = vperm.xlu0 %135, %v82
    %v137 = vpop.permute.xlu0 %136
    %139 = vset.pattern.permute.xlu0 1
    %140 = vperm.xlu0 %139, %v83
    %v141 = vpop.permute.xlu0 %140
    %v143 = vlaneseq
    %v144 = vshrl.u32 %v143, 7
    %v145 = vsub.s32 1, %v144
    %v146 = vrot.slane %v84, %v145
    %v147 = vsub.f32 %v137, %v146
    %v148 = vsub.f32 %v141, %v146
    %v149 = vand.u32 2147483647, %v147
    %v150 = vand.u32 2147483647, %v148
    %v151 = vadd.f32 %v133, %v149
    %v152 = vadd.f32 %v134, %v150
    %153 = vset.pattern.permute.xlu0 2
    %154 = vperm.xlu0 %153, %v82
    %v155 = vpop.permute.xlu0 %154
    %157 = vset.pattern.permute.xlu0 2
    %158 = vperm.xlu0 %157, %v83
    %v159 = vpop.permute.xlu0 %158
    %v161 = vlaneseq
    %v162 = vshrl.u32 %v161, 7
    %v163 = vsub.s32 2, %v162
    %v164 = vrot.slane %v84, %v163
    %v165 = vsub.f32 %v155, %v164
    %v166 = vsub.f32 %v159, %v164
    %v167 = vand.u32 2147483647, %v165
    %v168 = vand.u32 2147483647, %v166
    %v169 = vadd.f32 %v151, %v167
    %v170 = vadd.f32 %v152, %v168
    %171 = vset.pattern.permute.xlu0 3
    %172 = vperm.xlu0 %171, %v82
    %v173 = vpop.permute.xlu0 %172
    %175 = vset.pattern.permute.xlu0 3
    %176 = vperm.xlu0 %175, %v83
    %v177 = vpop.permute.xlu0 %176
    %v179 = vlaneseq
    %v180 = vshrl.u32 %v179, 7
    %v181 = vsub.s32 3, %v180
    %v182 = vrot.slane %v84, %v181
    %v183 = vsub.f32 %v173, %v182
    %v184 = vsub.f32 %v177, %v182
    %v185 = vand.u32 2147483647, %v183
    %v186 = vand.u32 2147483647, %v184
    %v187 = vadd.f32 %v169, %v185
    %v188 = vadd.f32 %v170, %v186
    %190 = vset.pattern.permute.xlu0 0
    %191 = vperm.xlu0 %190, %v111
    %v192 = vpop.permute.xlu0 %191
    %195 = vset.pattern.permute.xlu0 0
    %196 = vperm.xlu0 %195, %v112
    %v197 = vpop.permute.xlu0 %196
    %v199 = vlaneseq
    %v200 = vshrl.u32 %v199, 7
    %v201 = vsub.s32 0, %v200
    %v202 = vrot.slane %v118, %v201
    %v203 = vmin.f32 %v192, %v202
    %v204 = vmin.f32 %v197, %v202
    %206 = vset.pattern.permute.xlu0 0
    %207 = vperm.xlu0 %206, %v109
    %v208 = vpop.permute.xlu0 %207
    %211 = vset.pattern.permute.xlu0 0
    %212 = vperm.xlu0 %211, %v110
    %v213 = vpop.permute.xlu0 %212
    %v215 = vlaneseq
    %v216 = vshrl.u32 %v215, 7
    %v217 = vsub.s32 0, %v216
    %v218 = vrot.slane %v117, %v217
    %v219 = vmax.f32 %v208, %v218
    %v220 = vmax.f32 %v213, %v218
    %v221 = vsub.f32 %v203, %v219
    %v222 = vsub.f32 %v204, %v220
    %v223 = vmax.f32 %v221, 0.0
    %v224 = vmax.f32 %v222, 0.0
    %225 = vset.pattern.permute.xlu0 1
    %226 = vperm.xlu0 %225, %v111
    %v227 = vpop.permute.xlu0 %226
    %229 = vset.pattern.permute.xlu0 1
    %230 = vperm.xlu0 %229, %v112
    %v231 = vpop.permute.xlu0 %230
    %v233 = vlaneseq
    %v234 = vshrl.u32 %v233, 7
    %v235 = vsub.s32 1, %v234
    %v236 = vrot.slane %v118, %v235
    %v237 = vmin.f32 %v227, %v236
    %v238 = vmin.f32 %v231, %v236
    %239 = vset.pattern.permute.xlu0 1
    %240 = vperm.xlu0 %239, %v109
    %v241 = vpop.permute.xlu0 %240
    %243 = vset.pattern.permute.xlu0 1
    %244 = vperm.xlu0 %243, %v110
    %v245 = vpop.permute.xlu0 %244
    %v247 = vlaneseq
    %v248 = vshrl.u32 %v247, 7
    %v249 = vsub.s32 1, %v248
    %v250 = vrot.slane %v117, %v249
    %v251 = vmax.f32 %v241, %v250
    %v252 = vmax.f32 %v245, %v250
    %v253 = vsub.f32 %v237, %v251
    %v254 = vsub.f32 %v238, %v252
    %v255 = vmax.f32 %v253, 0.0
    %v256 = vmax.f32 %v254, 0.0
    %v257 = vmul.f32 %v223, %v255
    %v258 = vmul.f32 %v224, %v256
    %260 = vset.pattern.permute.xlu0 2
    %261 = vperm.xlu0 %260, %v93
    %v262 = vpop.permute.xlu0 %261
    %265 = vset.pattern.permute.xlu0 2
    %266 = vperm.xlu0 %265, %v94
    %v267 = vpop.permute.xlu0 %266
    %v269 = vlaneseq
    %v270 = vshrl.u32 %v269, 7
    %v271 = vsub.s32 2, %v270
    %v272 = vrot.slane %v98, %v271
    %v273 = vadd.f32 %v262, %v272
    %v274 = vadd.f32 %v267, %v272
    %v275 = vsub.f32 %v273, %v257
    %v276 = vsub.f32 %v274, %v258
    %v277 = vadd.f32 %v275, 1e-07
    %v278 = vadd.f32 %v276, 1e-07
    %v279 = vrcp.pop %v277
    %v280 = vrcp.pop %v278
    %v281 = vmul.f32 %v257, %v279
    %v282 = vmul.f32 %v258, %v280
    %v283 = vmax.f32 %v192, %v202
    %v284 = vmax.f32 %v197, %v202
    %v285 = vmin.f32 %v208, %v218
    %v286 = vmin.f32 %v213, %v218
    %v287 = vsub.f32 %v283, %v285
    %v288 = vsub.f32 %v284, %v286
    %v289 = vmax.f32 %v227, %v236
    %v290 = vmax.f32 %v231, %v236
    %v291 = vmin.f32 %v241, %v250
    %v292 = vmin.f32 %v245, %v250
    %v293 = vsub.f32 %v289, %v291
    %v294 = vsub.f32 %v290, %v292
    %v295 = vmul.f32 %v287, %v293
    %v296 = vmul.f32 %v288, %v294
    %v297 = vadd.f32 %v295, 1e-07
    %v298 = vadd.f32 %v296, 1e-07
    %v299 = vrcp.pop %v297
    %v300 = vrcp.pop %v298
    %v301 = vsub.f32 %v297, %v277
    %v302 = vsub.f32 %v298, %v278
    %v303 = vmul.f32 %v301, %v299
    %v304 = vmul.f32 %v302, %v300
    %v305 = vsub.f32 %v281, %v303
    %v306 = vsub.f32 %v282, %v304
    %v307 = vsub.f32 1.0, %v305
    %v308 = vsub.f32 1.0, %v306
    %v309 = vmul.f32 %v187, 5.0
    %v310 = vmul.f32 %v188, 5.0
    %vm311 = vcmask 261120
    %v313 = vsel %vm311, %v76, 0
    %v316 = vsel %vm311, %v77, 0
    %318 = vmatprep.subr.mxu0 0.0
    %319 = vmatpush1.msra.mxu0 %v78
    %320 = vmatprep.subr.mxu0 0.0
    %321 = vmatpush1.msra.mxu0 %v79
    %322 = vmatprep.subr.mxu0 0.0
    %323 = vmatpush1.msra.mxu0 %v80
    %324 = vmatprep.subr.mxu0 0.0
    %325 = vmatpush1.msra.mxu0 %v81
    %326 = vmatprep.subr.mxu0 0.0
    %327 = vmatpush1.msra.mxu0 0.0
    %328 = vmatprep.subr.mxu0 0.0
    %329 = vmatpush1.msra.mxu0 0.0
    %330 = vmatprep.subr.mxu0 0.0
    %331 = vmatpush1.msra.mxu0 0.0
    %332 = vmatprep.subr.mxu0 0.0
    %333 = vmatpush1.msra.mxu0 0.0
    %334 = vmatprep.subr.mxu0 0.0
    %335 = vmatpush1.msra.mxu0 0.0
    %336 = vmatprep.subr.mxu0 0.0
    %337 = vmatpush1.msra.mxu0 0.0
    %338 = vmatprep.subr.mxu0 0.0
    %339 = vmatpush1.msra.mxu0 0.0
    %340 = vmatprep.subr.mxu0 0.0
    %341 = vmatpush1.msra.mxu0 0.0
    %342 = vmatprep.subr.mxu0 0.0
    %343 = vmatpush1.msra.mxu0 0.0
    %344 = vmatprep.subr.mxu0 0.0
    %345 = vmatpush1.msra.mxu0 0.0
    %346 = vmatprep.subr.mxu0 0.0
    %347 = vmatpush1.msra.mxu0 0.0
    %348 = vmatprep.subr.mxu0 0.0
    %349 = vmatpush1.msra.mxu0 0.0
    %350 = vmatprep.subr.mxu0 0.0
    %351 = vmatpush1.msra.mxu0 0.0
    %352 = vmatprep.subr.mxu0 0.0
    %353 = vmatpush1.msra.mxu0 0.0
    %354 = vmatprep.subr.mxu0 0.0
    %355 = vmatpush1.msra.mxu0 0.0
    %356 = vmatprep.subr.mxu0 0.0
    %357 = vmatpush1.msra.mxu0 0.0
    %358 = vmatprep.subr.mxu0 0.0
    %359 = vmatpush1.msra.mxu0 0.0
    %360 = vmatprep.subr.mxu0 0.0
    %361 = vmatpush1.msra.mxu0 0.0
    %362 = vmatprep.subr.mxu0 0.0
    %363 = vmatpush1.msra.mxu0 0.0
    %364 = vmatprep.subr.mxu0 0.0
    %365 = vmatpush1.msra.mxu0 0.0
    %366 = vmatprep.subr.mxu0 0.0
    %367 = vmatpush1.msra.mxu0 0.0
    %368 = vmatprep.subr.mxu0 0.0
    %369 = vmatpush1.msra.mxu0 0.0
    %370 = vmatprep.subr.mxu0 0.0
    %371 = vmatpush1.msra.mxu0 0.0
    %372 = vmatprep.subr.mxu0 0.0
    %373 = vmatpush1.msra.mxu0 0.0
    %374 = vmatprep.subr.mxu0 0.0
    %375 = vmatpush1.msra.mxu0 0.0
    %376 = vmatprep.subr.mxu0 0.0
    %377 = vmatpush1.msra.mxu0 0.0
    %378 = vmatprep.subr.mxu0 0.0
    %379 = vmatpush1.msra.mxu0 0.0
    %380 = vmatprep.subr.mxu0 0.0
    %381 = vmatpush1.msra.mxu0 0.0
    %382 = vmatprep.mubr.f32.mxu0 0.0
    %383 = vmatmul.mubr.f32.gmra.mrb[0].mxu0 %v313
    %v384 = vpop.f32.mrb[0].mxu0
    %v385 = vadd.f32 %v309, %v384
    %v386 = vpop.f32.mrb[0].mxu0
    %387 = vmatprep.mubr.f32.mxu0 0.0
    %388 = vmatmul.mubr.f32.gmra.mrb[0].mxu0 %v316
    %v389 = vpop.f32.mrb[0].mxu0
    %v390 = vadd.f32 %v310, %v389
    %v391 = vpop.f32.mrb[0].mxu0
    %392 = vdwg.mxu0
    %v393 = vmul.f32 %v307, 2.0
    %v394 = vmul.f32 %v308, 2.0
    %v395 = vadd.f32 %v385, %v393
    %v396 = vadd.f32 %v390, %v394
    %vm397 = vweird.f32 %v395
    %vm398 = vweird.f32 %v396
    %vm399 = vmxor %vm397, 1
    %vm400 = vmxor %vm398, 1
    %v401 = vsel %vm399, %v395, 0.0
    %v402 = vsel %vm400, %v396, 0.0
    %403 = vst [vmem:[#allocation5] sm:$0xff] %v401
    %404 = vst [vmem:[#allocation5 + $0x8] sm:$0xff] %v402
    // Predicated region
    $region22: #{tpu_custom_call.1} parent=1 // pred_check
      _
    $region23: #{tpu_custom_call.1} parent=1 // pred_check_branch
      %406 = sbr.rel (0) target = $region25
    $region24: #{tpu_custom_call.1} parent=1 // pred_region
      %s408 = ssub.s32 256, 256
      %409 = vsyncadd [#allocation4], %s408
      %s410 = sshll.u32 [#allocation5], 4
      %s411 = int_to_ptr.vmem [resolvable:$true] %s410
      %416 = dma.vmem_to_hbm [thread:$0]  %s411, 256, %s4, [#allocation4], 128, 128, 8
    $region25: #{tpu_custom_call.1} parent=1 // pred_fallthru
      _
    // Predicated region
    $region26: #{tpu_custom_call.1} parent=1 // pred_check
      _
    $region27: #{tpu_custom_call.1} parent=1 // pred_check_branch
      %418 = sbr.rel (0) target = $region29
    $region28: #{tpu_custom_call.1} parent=1 // pred_region
      %419 = dma.done [#allocation4], 256
    $region29: #{tpu_custom_call.1} parent=1 // pred_fallthru
      _
    %420 = vsyncpa [#allocation3], 1
    %421 = vsyncpa [#allocation4], 1

</llo_original>
